<compile_context>
chip_gen: v7x
topology: tpu7x:2x2x1
jax: 0.10.0
libtpu: 0.0.40
codegen_flags: <defaults>
</compile_context>

<pallas_src>
from functools import partial

import jax
import jax.numpy as jnp
from jax.experimental import pallas as pl
from jax.experimental.pallas import tpu as pltpu


def _round_up(x, m):
    return (x + m - 1) // m * m


def conv_bn_silu_kernel(x_ref, w_ref, ss_ref, o_ref):
    """One grid step = one (image, spatial row-tile).

    x_ref:  (1, TM, K)   im2col'd input rows (K = KH*KW*C1, lane-contiguous)
    w_ref:  (K, C2)      conv weight as a single im2col matrix
    ss_ref: (2, C2)      row 0 = BN scale, row 1 = BN shift (f32)
    o_ref:  (1, TM, C2)  output rows (exactly C2 channels, no lane padding in HBM)
    """
    acc = jnp.dot(x_ref[0], w_ref[...],
                  preferred_element_type=jnp.float32)      # (TM, C2) f32 on MXU
    ss = ss_ref[...]                                       # (2, C2) f32
    y = acc * ss[0:1, :] + ss[1:2, :]                      # fused BatchNorm (eval)
    y = y * jax.nn.sigmoid(y)                              # SiLU
    o_ref[0] = y.astype(o_ref.dtype)


# ---------------------------------------------------------------------------
# VMEM sizing helpers (count the *padded* lane layout, not raw bytes).
# ---------------------------------------------------------------------------
def _padded_block_bytes(rows, cols, itemsize):
    """VMEM footprint of a (rows, cols) tile: minor dim padded to 128 lanes,
    second-minor padded to the 8-row sublane tile (bf16 packs 2 rows/sublane,
    so the byte count is the same to first order)."""
    return _round_up(max(rows, 1), 8) * _round_up(max(cols, 1), 128) * itemsize


def _step_vmem_bytes(tm, kdim, c2, in_itemsize, out_itemsize):
    in_blk = _padded_block_bytes(tm, kdim, in_itemsize)
    out_blk = _padded_block_bytes(tm, c2, out_itemsize)
    w_blk = _padded_block_bytes(kdim, c2, in_itemsize)
    ss_blk = _padded_block_bytes(2, c2, 4)
    acc_blk = _padded_block_bytes(tm, c2, 4)       # f32 matmul accumulator/epilogue
    # pipelined in/out blocks are double-buffered; weight/scale stay resident.
    return 2 * (in_blk + out_blk) + w_blk + ss_blk + acc_blk


def _vmem_capacity_bytes():
    # Capability probe only (NOT a lowering fallback): if the query is
    # unavailable, assume the smallest per-TensorCore VMEM (v7x: 64 MiB).
    try:
        cap = getattr(pltpu.get_tpu_info(), "vmem_capacity_bytes", None)
        if cap:
            return int(cap)
    except Exception:
        pass
    return 64 << 20


def _pick_row_tile(m, kdim, c2, in_itemsize, out_itemsize, budget_bytes):
    """Largest legal spatial tile (divisor of m that is a multiple of 8, or m
    itself) whose estimated per-step VMEM fits the budget."""
    cands = [d for d in range(8, m + 1, 8) if m % d == 0]
    if m not in cands:
        cands.append(m)          # full extent is always a legal block shape
    fitting = [d for d in cands
               if _step_vmem_bytes(d, kdim, c2, in_itemsize, out_itemsize)
               <= budget_bytes]
    if fitting:
        return max(fitting)      # big M amortizes per-step overhead & MXU drain
    # Nothing fits the budget: take the smallest legal tile; the raised
    # vmem_limit below still has headroom for it on every generation.
    return min(cands)


# ---------------------------------------------------------------------------
# Module forward
# ---------------------------------------------------------------------------
def conv_module_forward(x_nchw, w_oihw, gamma, beta, running_mean, running_var,
                        *, stride=1, pad=None, eps=1e-5, row_tile=None,
                        compute_dtype=jnp.bfloat16, out_dtype=jnp.float32):
    """Equivalent of Conv.forward(x): Conv2d(k, s=1, p=autopad(k), bias=False)
    -> BatchNorm2d (running stats / eval mode) -> SiLU."""
    N, C1, H, W = x_nchw.shape
    C2, C1w, KH, KW = w_oihw.shape
    assert C1w == C1, "groups != 1 / dilation != 1 not supported"
    assert stride == 1, "kernel implemented for stride=1 (the module default)"
    if pad is None:
        pad = KH // 2                         # autopad -> 'same' output
    assert pad == KH // 2 == KW // 2, "only 'same' (autopad) padding supported"

    Kdim = KH * KW * C1
    M = H * W
    in_itemsize = jnp.dtype(compute_dtype).itemsize
    out_itemsize = jnp.dtype(out_dtype).itemsize

    # ---- per-generation VMEM sizing (v7x: 64 MiB/TC, v5e/v6e: 128 MiB) ----
    vmem_cap = _vmem_capacity_bytes()
    vmem_limit = min(vmem_cap * 5 // 8, 96 << 20)   # ~40 MiB on v7x, 80 MiB on v5e/v6e
    tile_budget = vmem_limit // 4                   # ~10 MiB on v7x, 20 MiB on v5e/v6e

    if row_tile is None:
        row_tile = _pick_row_tile(M, Kdim, C2, in_itemsize, out_itemsize,
                                  tile_budget)
    TM = int(row_tile)
    if M % TM != 0:
        raise ValueError(f"row_tile={TM} must divide H*W={M}")
    if TM != M and TM % 8 != 0:
        raise ValueError(f"row_tile={TM} must be a multiple of 8 (or equal H*W)")
    n_tiles = M // TM

    # ---- glue (plain JAX): layout, pad, wrapper-side im2col, BN folding ----
    x_nhwc = jnp.transpose(x_nchw, (0, 2, 3, 1)).astype(compute_dtype)
    x_pad = jnp.pad(x_nhwc, ((0, 0), (pad, pad), (pad, pad), (0, 0)))
    # im2col in the wrapper (small-C1 regime): the minor dim becomes KH*KW*C1,
    # so the kernel contraction is lane-contiguous and there are no in-kernel
    # shifted-slice relayouts.
    patches = [x_pad[:, ki:ki + H, kj:kj + W, :]
               for ki in range(KH) for kj in range(KW)]
    x_col = jnp.concatenate(patches, axis=-1).reshape(N, M, Kdim)

    # OIHW -> (KH*KW*C1, C2), rows ordered (ki, kj, c1) to match x_col.
    w_mat = (jnp.transpose(w_oihw, (2, 3, 1, 0))
             .reshape(Kdim, C2).astype(compute_dtype))

    scale = (gamma / jnp.sqrt(running_var + eps)).astype(jnp.float32)
    shift = (beta - running_mean * scale).astype(jnp.float32)
    ss = jnp.stack([scale, shift])                        # (2, C2) f32

    out = pl.pallas_call(
        conv_bn_silu_kernel,
        out_shape=jax.ShapeDtypeStruct((N, M, C2), out_dtype),
        grid_spec=pltpu.PrefetchScalarGridSpec(
            num_scalar_prefetch=0,
            grid=(N, n_tiles),
            in_specs=[
                pl.BlockSpec((1, TM, Kdim), lambda n, t: (n, t, 0)),
                # Constant-index blocks: weight and folded BN params stay
                # resident in VMEM across the whole grid.
                pl.BlockSpec((Kdim, C2), lambda n, t: (0, 0)),
                pl.BlockSpec((2, C2), lambda n, t: (0, 0)),
            ],
            # Exactly C2 channels are written back -- no padded bytes to HBM.
            out_specs=pl.BlockSpec((1, TM, C2), lambda n, t: (n, t, 0)),
        ),
        compiler_params=pltpu.CompilerParams(
            dimension_semantics=("parallel", "parallel"),   # batch x row-tiles
            vmem_limit_bytes=int(vmem_limit),
        ),
    )(x_col, w_mat, ss)

    # (N, H*W, C2) -> (N, C2, H, W); no padded channels are ever read back.
    return jnp.transpose(out.reshape(N, H, W, C2), (0, 3, 1, 2))


def reference_forward(x, w, gamma, beta, running_mean, running_var, eps=1e-5):
    """Pure-JAX reference matching the PyTorch module (eval-mode BN)."""
    k = w.shape[-1]
    p = k // 2
    y = jax.lax.conv_general_dilated(
        x, w, window_strides=(1, 1), padding=((p, p), (p, p)),
        dimension_numbers=("NCHW", "OIHW", "NCHW"))
    scale = gamma / jnp.sqrt(running_var + eps)
    shift = beta - running_mean * scale
    y = y * scale[None, :, None, None] + shift[None, :, None, None]
    return y * jax.nn.sigmoid(y)


if __name__ == "__main__":
    # Conv(c1=4, c2=8, k=3) -> conv(3x3, s=1, p=1, bias=False) + BN(8) + SiLU
    N, C1, C2, H, W, K = 2, 4, 8, 16, 16, 3

    key = jax.random.PRNGKey(0)
    kx, kw, kg, kb, km, kv = jax.random.split(key, 6)

    x = jax.random.normal(kx, (N, C1, H, W), dtype=jnp.float32)
    w = jax.random.normal(kw, (C2, C1, K, K), dtype=jnp.float32) * 0.1
    gamma = 1.0 + 0.1 * jax.random.normal(kg, (C2,), dtype=jnp.float32)
    beta = 0.1 * jax.random.normal(kb, (C2,), dtype=jnp.float32)
    running_mean = 0.1 * jax.random.normal(km, (C2,), dtype=jnp.float32)
    running_var = 0.5 + jnp.abs(jax.random.normal(kv, (C2,), dtype=jnp.float32))

    ref = reference_forward(x, w, gamma, beta, running_mean, running_var)

    # 1) f32 MXU path, explicit spatial tile of 128 rows -> grid (2, 2).
    out_f32 = conv_module_forward(x, w, gamma, beta, running_mean, running_var,
                                  row_tile=128, compute_dtype=jnp.float32)
    out_f32 = jax.block_until_ready(out_f32)
    assert out_f32.shape == (N, C2, H, W), out_f32.shape
    assert jnp.allclose(out_f32, ref, rtol=1e-4, atol=1e-4), \
        float(jnp.max(jnp.abs(out_f32 - ref)))

    # 2) default path: bf16 MXU inputs, auto row tile, f32 output.
    out_def = conv_module_forward(x, w, gamma, beta, running_mean, running_var)
    out_def = jax.block_until_ready(out_def)
    assert out_def.shape == (N, C2, H, W), out_def.shape
    assert jnp.allclose(out_def, ref, rtol=5e-2, atol=5e-2), \
        float(jnp.max(jnp.abs(out_def - ref)))

    # 3) bf16 output (halved HBM writeback) when the consumer allows it.
    out_bf16 = conv_module_forward(x, w, gamma, beta, running_mean, running_var,
                                   out_dtype=jnp.bfloat16)
    out_bf16 = jax.block_until_ready(out_bf16)
    assert out_bf16.dtype == jnp.bfloat16
    assert jnp.allclose(out_bf16.astype(jnp.float32), ref,
                        rtol=5e-2, atol=5e-2), \
        float(jnp.max(jnp.abs(out_bf16.astype(jnp.float32) - ref)))

    print("KERNEL_OK")
</pallas_src>

<mosaic_0001>
module attributes {stable_mosaic.version = 11 : i64} {
  func.func @conv_bn_silu_kernel(%arg0: i32, %arg1: i32, %arg2: memref<1x128x36xf32, #tpu.memory_space<vmem>>, %arg3: memref<36x8xf32, #tpu.memory_space<vmem>>, %arg4: memref<2x8xf32, #tpu.memory_space<vmem>>, %arg5: memref<1x128x8xf32, #tpu.memory_space<vmem>>) attributes {dimension_semantics = [#tpu.dimension_semantics<parallel>, #tpu.dimension_semantics<parallel>], iteration_bounds = array<i64: 2, 2>, scalar_prefetch = 0 : i64, scratch_operands = 0 : i64, tpu.core_type = #tpu.core_type<tc>, window_params = [{transform_indices = @transform_0, window_bounds = array<i64: 1, 128, 36>}, {pipeline_mode = #tpu.pipeline_mode<synchronous>, transform_indices = @transform_1, window_bounds = array<i64: 36, 8>}, {pipeline_mode = #tpu.pipeline_mode<synchronous>, transform_indices = @transform_2, window_bounds = array<i64: 2, 8>}, {transform_indices = @transform_3, window_bounds = array<i64: 1, 128, 8>}]} {
    %c0 = arith.constant 0 : index
    %c0_0 = arith.constant 0 : index
    %c0_1 = arith.constant 0 : index
    %0 = vector.load %arg2[%c0, %c0_0, %c0_1] : memref<1x128x36xf32, #tpu.memory_space<vmem>>, vector<1x128x36xf32>
    %1 = vector.shape_cast %0 : vector<1x128x36xf32> to vector<128x36xf32>
    %c0_2 = arith.constant 0 : index
    %c0_3 = arith.constant 0 : index
    %2 = vector.load %arg3[%c0_2, %c0_3] : memref<36x8xf32, #tpu.memory_space<vmem>>, vector<36x8xf32>
    %cst = arith.constant dense<0.000000e+00> : vector<128x8xf32>
    %3 = tpu.matmul %1, %2, %cst {dimension_numbers = #tpu.dot_dimension_numbers<[1], [0], [0], [1], [0, 0, 1, 1], [], []>} : vector<128x36xf32>, vector<36x8xf32>, vector<128x8xf32> -> vector<128x8xf32>
    %c0_4 = arith.constant 0 : index
    %c0_5 = arith.constant 0 : index
    %4 = vector.load %arg4[%c0_4, %c0_5] : memref<2x8xf32, #tpu.memory_space<vmem>>, vector<2x8xf32>
    %5 = vector.extract_strided_slice %4 {offsets = [0, 0], sizes = [1, 8], strides = [1, 1]} : vector<2x8xf32> to vector<1x8xf32>
    %6 = vector.broadcast %5 : vector<1x8xf32> to vector<128x8xf32>
    %7 = arith.mulf %3, %6 : vector<128x8xf32>
    %8 = vector.extract_strided_slice %4 {offsets = [1, 0], sizes = [1, 8], strides = [1, 1]} : vector<2x8xf32> to vector<1x8xf32>
    %9 = vector.broadcast %8 : vector<1x8xf32> to vector<128x8xf32>
    %10 = arith.addf %7, %9 : vector<128x8xf32>
    %11 = arith.negf %10 : vector<128x8xf32>
    %12 = math.exp %11 : vector<128x8xf32>
    %cst_6 = arith.constant 1.000000e+00 : f32
    %13 = vector.broadcast %cst_6 : f32 to vector<128x8xf32>
    %14 = arith.addf %13, %12 : vector<128x8xf32>
    %15 = arith.divf %13, %14 : vector<128x8xf32>
    %16 = arith.mulf %10, %15 : vector<128x8xf32>
    %c0_7 = arith.constant 0 : index
    %c0_8 = arith.constant 0 : index
    %c0_9 = arith.constant 0 : index
    %17 = vector.load %arg5[%c0_7, %c0_8, %c0_9] : memref<1x128x8xf32, #tpu.memory_space<vmem>>, vector<1x128x8xf32>
    %18 = vector.shape_cast %17 : vector<1x128x8xf32> to vector<128x8xf32>
    %19 = vector.shape_cast %16 : vector<128x8xf32> to vector<1x128x8xf32>
    tpu.vector_store %arg5[%c0_7, %c0_8, %c0_9], %19 {strides = array<i32>} : memref<1x128x8xf32, #tpu.memory_space<vmem>>, vector<1x128x8xf32>,
    return
  }
  func.func @transform_0(%arg0: i32, %arg1: i32) -> (i32, i32, i32) {
    %c0_i32 = arith.constant 0 : i32
    %c0_i32_0 = arith.constant 0 : i32
    return %arg0, %arg1, %c0_i32 : i32, i32, i32
  }
  func.func @transform_1(%arg0: i32, %arg1: i32) -> (i32, i32) {
    %c0_i32 = arith.constant 0 : i32
    %c0_i32_0 = arith.constant 0 : i32
    %c0_i32_1 = arith.constant 0 : i32
    return %c0_i32, %c0_i32_0 : i32, i32
  }
  func.func @transform_2(%arg0: i32, %arg1: i32) -> (i32, i32) {
    %c0_i32 = arith.constant 0 : i32
    %c0_i32_0 = arith.constant 0 : i32
    %c0_i32_1 = arith.constant 0 : i32
    return %c0_i32, %c0_i32_0 : i32, i32
  }
  func.func @transform_3(%arg0: i32, %arg1: i32) -> (i32, i32, i32) {
    %c0_i32 = arith.constant 0 : i32
    %c0_i32_0 = arith.constant 0 : i32
    return %arg0, %arg1, %c0_i32 : i32, i32, i32
  }
}

</mosaic_0001>

<llo_original>
// kernel: tpu_custom_call.1
$region0: #{tpu_custom_call.1}
  #allocation0 [shape = 'u32[]', space=smem, size = 0x4, offset = 0x4, fixed_abs, tag = 'smem constant byte address 0x4 - core index']
  #allocation1 [shape = 'u32[144,128]{1,0:T(1,128)}', space=vmem, size = 0x12000, scoped, tag = 'internal scratch']
  %s0 = inlined_call_operand.vmem [shape: f32[2,256,36], index: 0, kind: input, shape index: {}]
  %s1 = inlined_call_operand.vmem [shape: f32[36,8], index: 1, kind: input, shape index: {}]
  %s2 = inlined_call_operand.vmem [shape: f32[2,8], index: 2, kind: input, shape index: {}]
  %s3 = inlined_call_operand.vmem [shape: f32[2,256,8], index: 3, kind: output, shape index: {}]
  %s4 = sld [smem:[#allocation0]]
  $region45: #{tpu_custom_call.1} parent=0
    _
  %s6 = ssub.s32 1, %s4
  %s7 = scalar_select 0, %s6, %s4
  loop: start=0, step=1, limit=6
  $region2: #{tpu_custom_call.1} parent=0 // loop_pre_header
    _
  $region3: #{tpu_custom_call.1} parent=0 // loop_header
    %s9 = sphi 0, %s13
    %p10 = scmp.ge.s32.totalorder %s9, 6
    %s16 = sphi 0, %s28
    %s17 = sphi 0, %s24
    %s18 = sphi 0, %s16
    %s19 = sphi 0, %s17
    %s20 = sphi 0, %s18
    %s21 = sphi 0, %s19
    %s33 = sphi 0, %s35
    %s36 = sphi 0, %s33
    %s37 = sphi 0, %s36
    %s53 = sphi 0, %s37
    %s57 = sphi 0, %s57
    %s59 = sphi 0, %s57
    %s60 = sphi 0, %s59
    %s74 = sphi 0, %s60
    %s78 = sphi 0, %s78
    %s80 = sphi 0, %s78
    %s81 = sphi 0, %s80
    %s95 = sphi 0, %s81
    %s103 = sphi 0, %s105
    %s106 = sphi 0, %s103
    %s107 = sphi 0, %s106
    %s123 = sphi 0, %s107
  $region4: #{tpu_custom_call.1} parent=0 // loop_header_branch
    %12 = sbr.rel (%p10) target = $region8
  $region5: #{tpu_custom_call.1} parent=0 // loop_body
    %s14 = ssub.s32 %s9, 1
    %s15 = ssub.s32 %s9, 2
    %s22 = sadd.s32 1, %s17
    %p23 = scmp.ge.s32.totalorder %s22, 2
    %s24 = scalar_select %p23, 0, %s22
    %s25 = sadd.s32 1, %s16
    %s26 = scalar_select %p23, %s25, %s16
    %p27 = scmp.ge.s32.totalorder %s26, 2
    %s28 = scalar_select %p27, 0, %s26
    %s29 = ssub.s32 %s16, %s28
    %s30 = ssub.s32 %s17, %s24
    %s31 = sor.u32 %s29, %s30
    %p32 = scmp.eq.s32.totalorder %s31, 0
    %s34 = sadd.s32 %s33, 1
    %s35 = scalar_select %p32, %s33, %s34
    %p38 = pneg %p32
    %p39 = scmp.eq.s32.totalorder %s9, 3
    %p40 = por %p38, %p39
    %p41 = scmp.ne.s32.totalorder %s33, %s36
    %p42 = scmp.eq.s32.totalorder %s9, 0
    %p43 = por %p41, %p42
    %p44 = scmp.ne.s32.totalorder %s33, %s36
    %p45 = scmp.eq.s32.totalorder %s14, 3
    %p46 = por %p44, %p45
    %p47 = scmp.ne.s32.totalorder %s36, %s37
    %p48 = scmp.eq.s32.totalorder %s14, 0
    %p49 = por %p47, %p48
    %p50 = scmp.ne.s32.totalorder %s36, %s37
    %p51 = scmp.eq.s32.totalorder %s15, 3
    %p52 = por %p50, %p51
    %p54 = scmp.ne.s32.totalorder %s37, %s53
    %p55 = scmp.eq.s32.totalorder %s15, 0
    %p56 = por %p54, %p55
    %s58 = sadd.s32 %s57, 1
    %p61 = scmp.eq.s32.totalorder %s9, 3
    %p62 = scmp.ne.s32.totalorder %s57, %s59
    %p63 = scmp.eq.s32.totalorder %s9, 0
    %p64 = por %p62, %p63
    %p65 = scmp.ne.s32.totalorder %s57, %s59
    %p66 = scmp.eq.s32.totalorder %s14, 3
    %p67 = por %p65, %p66
    %p68 = scmp.ne.s32.totalorder %s59, %s60
    %p69 = scmp.eq.s32.totalorder %s14, 0
    %p70 = por %p68, %p69
    %p71 = scmp.ne.s32.totalorder %s59, %s60
    %p72 = scmp.eq.s32.totalorder %s15, 3
    %p73 = por %p71, %p72
    %p75 = scmp.ne.s32.totalorder %s60, %s74
    %p76 = scmp.eq.s32.totalorder %s15, 0
    %p77 = por %p75, %p76
    %s79 = sadd.s32 %s78, 1
    %p82 = scmp.eq.s32.totalorder %s9, 3
    %p83 = scmp.ne.s32.totalorder %s78, %s80
    %p84 = scmp.eq.s32.totalorder %s9, 0
    %p85 = por %p83, %p84
    %p86 = scmp.ne.s32.totalorder %s78, %s80
    %p87 = scmp.eq.s32.totalorder %s14, 3
    %p88 = por %p86, %p87
    %p89 = scmp.ne.s32.totalorder %s80, %s81
    %p90 = scmp.eq.s32.totalorder %s14, 0
    %p91 = por %p89, %p90
    %p92 = scmp.ne.s32.totalorder %s80, %s81
    %p93 = scmp.eq.s32.totalorder %s15, 3
    %p94 = por %p92, %p93
    %p96 = scmp.ne.s32.totalorder %s81, %s95
    %p97 = scmp.eq.s32.totalorder %s15, 0
    %p98 = por %p96, %p97
    %s99 = ssub.s32 %s16, %s28
    %s100 = ssub.s32 %s17, %s24
    %s101 = sor.u32 %s99, %s100
    %p102 = scmp.eq.s32.totalorder %s101, 0
    %s104 = sadd.s32 %s103, 1
    %s105 = scalar_select %p102, %s103, %s104
    %p108 = pneg %p102
    %p109 = scmp.eq.s32.totalorder %s9, 3
    %p110 = por %p108, %p109
    %p111 = scmp.ne.s32.totalorder %s103, %s106
    %p112 = scmp.eq.s32.totalorder %s9, 0
    %p113 = por %p111, %p112
    %p114 = scmp.ne.s32.totalorder %s103, %s106
    %p115 = scmp.eq.s32.totalorder %s14, 3
    %p116 = por %p114, %p115
    %p117 = scmp.ne.s32.totalorder %s106, %s107
    %p118 = scmp.eq.s32.totalorder %s14, 0
    %p119 = por %p117, %p118
    %p120 = scmp.ne.s32.totalorder %s106, %s107
    %p121 = scmp.eq.s32.totalorder %s15, 3
    %p122 = por %p120, %p121
    %p124 = scmp.ne.s32.totalorder %s107, %s123
    %p125 = scmp.eq.s32.totalorder %s15, 0
    %p126 = por %p124, %p125
    %p127 = scmp.le.s32.totalorder 1, %s9
    %p128 = scmp.lt.s32.totalorder %s9, 5
    %p129 = pnand %p127, %p128
    %p130 = pneg %p129
    // Predicated region
    $region9: #{tpu_custom_call.1} parent=5 // pred_check
      _
    $region10: #{tpu_custom_call.1} parent=5 // pred_check_branch
      %132 = sbr.rel (%p129) target = $region12
    $region11: #{tpu_custom_call.1} parent=5 // pred_region
      %s133 = ssub.s32 %s9, 1
      // Predicated region
      $region13: #{tpu_custom_call.1} parent=11 // pred_check
        %p134 = pneg %p70
      $region14: #{tpu_custom_call.1} parent=11 // pred_check_branch
        %136 = sbr.rel (%p134) target = $region16
      $region15: #{tpu_custom_call.1} parent=11 // pred_region
        _
      $region16: #{tpu_custom_call.1} parent=11 // pred_fallthru
        _
      // Predicated region
      $region17: #{tpu_custom_call.1} parent=11 // pred_check
        %p137 = pneg %p91
      $region18: #{tpu_custom_call.1} parent=11 // pred_check_branch
        %139 = sbr.rel (%p137) target = $region20
      $region19: #{tpu_custom_call.1} parent=11 // pred_region
        _
      $region20: #{tpu_custom_call.1} parent=11 // pred_fallthru
        _
    $region12: #{tpu_custom_call.1} parent=5 // pred_fallthru
      _
    %p140 = scmp.lt.s32.totalorder %s9, 4
    // Predicated region
    $region21: #{tpu_custom_call.1} parent=5 // pred_check
      %p141 = pneg %p140
    $region22: #{tpu_custom_call.1} parent=5 // pred_check_branch
      %143 = sbr.rel (%p141) target = $region24
    $region23: #{tpu_custom_call.1} parent=5 // pred_region
      // Predicated region
      $region25: #{tpu_custom_call.1} parent=23 // pred_check
        %p144 = pneg %p43
      $region26: #{tpu_custom_call.1} parent=23 // pred_check_branch
        %146 = sbr.rel (%p144) target = $region28
      $region27: #{tpu_custom_call.1} parent=23 // pred_region
        %s147 = smul.u32 16, %s17
        %p148 = scmp.lt.s32.totalorder %s16, 1
        %s149 = scalar_select %p148, %s16, 1
        %p150 = scmp.lt.s32.totalorder %s147, 31
        %s151 = scalar_select %p150, %s147, 31
        %s152 = smul.addr %s149, 32
        %s153 = sadd.s32 %s151, %s152
        %s154 = smul.addr %s153, 8
        %s155 = scalar_lea.vmem %s0, %s154
        %s156 = smul.u32 16, %s17
      $region28: #{tpu_custom_call.1} parent=23 // pred_fallthru
        _
    $region24: #{tpu_custom_call.1} parent=5 // pred_fallthru
      _
    %p157 = scmp.le.s32.totalorder 1, %s9
    %p158 = scmp.lt.s32.totalorder %s9, 5
    %p159 = pnand %p157, %p158
    %p160 = pneg %p159
    // Predicated region
    $region29: #{tpu_custom_call.1} parent=5 // pred_check
      _
    $region30: #{tpu_custom_call.1} parent=5 // pred_check_branch
      %162 = sbr.rel (%p159) target = $region32
    $region31: #{tpu_custom_call.1} parent=5 // pred_region
      %s163 = ssub.s32 %s9, 1
      %s164 = smul.u32 16, %s19
      %p165 = scmp.lt.s32.totalorder %s18, 1
      %s166 = scalar_select %p165, %s18, 1
      %p167 = scmp.lt.s32.totalorder %s164, 31
      %s168 = scalar_select %p167, %s164, 31
      %s169 = smul.addr %s166, 32
      %s170 = sadd.s32 %s168, %s169
      %s171 = smul.addr %s170, 8
      %s172 = scalar_lea.vmem %s0, %s171
      %p173 = pneg %p49
      %p174 = pneg %p46
      %p175 = pneg %p70
      %p176 = pneg %p67
      %p177 = pneg %p91
      %p178 = pneg %p88
      %p179 = pneg %p119
      %p180 = pneg %p116
      %s181 = smul.u32 16, %s19
      %p182 = scmp.lt.s32.totalorder %s18, 1
      %s183 = scalar_select %p182, %s18, 1
      %p184 = scmp.lt.s32.totalorder %s181, 31
      %s185 = scalar_select %p184, %s181, 31
      %s186 = smul.addr %s183, 32
      %s187 = sadd.s32 %s185, %s186
      %s188 = smul.addr %s187, 8
      %s189 = scalar_lea.vmem %s3, %s188
      %s190 = smul.u32 16, %s19
      %p191 = scmp.lt.s32.totalorder %s18, 1
      %s192 = scalar_select %p191, %s18, 1
      %p193 = scmp.lt.s32.totalorder %s190, 31
      %s194 = scalar_select %p193, %s190, 31
      %s195 = smul.addr %s192, 32
      %s196 = sadd.s32 %s194, %s195
      %s197 = smul.addr %s196, 8
      %s198 = scalar_lea.vmem %s0, %s197
      %s199 = smul.u32 16, %s19
      %s200 = smul.u32 16, %s19
      %p201 = scmp.lt.s32.totalorder %s18, 1
      %s202 = scalar_select %p201, %s18, 1
      %p203 = scmp.lt.s32.totalorder %s200, 31
      %s204 = scalar_select %p203, %s200, 31
      %s205 = smul.addr %s202, 32
      %s206 = sadd.s32 %s204, %s205
      %s207 = smul.addr %s206, 8
      %s208 = scalar_lea.vmem %s3, %s207
      %s209 = smul.u32 16, %s19
      %v210 = vld [vmem:[%s198] sm:$0xff]
      %v211 = vld [vmem:[%s198 + $0x8] sm:$0xff]
      %v212 = vld [vmem:[%s198 + $0x10] sm:$0xff]
      %v213 = vld [vmem:[%s198 + $0x18] sm:$0xff]
      %v214 = vld [vmem:[%s198 + $0x20] sm:$0xff]
      %v215 = vld [vmem:[%s198 + $0x28] sm:$0xff]
      %v216 = vld [vmem:[%s198 + $0x30] sm:$0xff]
      %v217 = vld [vmem:[%s198 + $0x38] sm:$0xff]
      %v218 = vld [vmem:[%s198 + $0x40] sm:$0xff]
      %v219 = vld [vmem:[%s198 + $0x48] sm:$0xff]
      %v220 = vld [vmem:[%s198 + $0x50] sm:$0xff]
      %v221 = vld [vmem:[%s198 + $0x58] sm:$0xff]
      %v222 = vld [vmem:[%s198 + $0x60] sm:$0xff]
      %v223 = vld [vmem:[%s198 + $0x68] sm:$0xff]
      %v224 = vld [vmem:[%s198 + $0x70] sm:$0xff]
      %v225 = vld [vmem:[%s198 + $0x78] sm:$0xff]
      %v226 = vld [vmem:[%s1] sm:$0xff]
      %v227 = vld [vmem:[%s1 + $0x8] sm:$0xff]
      %v228 = vld [vmem:[%s1 + $0x10] sm:$0xff]
      %v229 = vld [vmem:[%s1 + $0x18] sm:$0xff]
      %v230 = vld [vmem:[%s1 + $0x20] sm:$0xf]
      %vm231 = vcmask 293888
      %v233 = vsel %vm231, %v210, 0
      %v236 = vsel %vm231, %v211, 0
      %v239 = vsel %vm231, %v212, 0
      %v242 = vsel %vm231, %v213, 0
      %v245 = vsel %vm231, %v214, 0
      %v248 = vsel %vm231, %v215, 0
      %v251 = vsel %vm231, %v216, 0
      %v254 = vsel %vm231, %v217, 0
      %v257 = vsel %vm231, %v218, 0
      %v260 = vsel %vm231, %v219, 0
      %v263 = vsel %vm231, %v220, 0
      %v266 = vsel %vm231, %v221, 0
      %v269 = vsel %vm231, %v222, 0
      %v272 = vsel %vm231, %v223, 0
      %v275 = vsel %vm231, %v224, 0
      %v278 = vsel %vm231, %v225, 0
      %vm280 = vcmask 1043456
      %v282 = vsel %vm280, %v230, 0
      %284 = vmatprep.subr.mxu0 0.0
      %285 = vmatpush1.msra.mxu0 %v226
      %286 = vmatprep.subr.mxu0 0.0
      %287 = vmatpush1.msra.mxu0 %v227
      %288 = vmatprep.subr.mxu0 0.0
      %289 = vmatpush1.msra.mxu0 %v228
      %290 = vmatprep.subr.mxu0 0.0
      %291 = vmatpush1.msra.mxu0 %v229
      %292 = vmatprep.subr.mxu0 0.0
      %293 = vmatpush1.msra.mxu0 %v282
      %294 = vmatprep.subr.mxu0 0.0
      %295 = vmatpush1.msra.mxu0 0.0
      %296 = vmatprep.subr.mxu0 0.0
      %297 = vmatpush1.msra.mxu0 0.0
      %298 = vmatprep.subr.mxu0 0.0
      %299 = vmatpush1.msra.mxu0 0.0
      %300 = vmatprep.subr.mxu0 0.0
      %301 = vmatpush1.msra.mxu0 0.0
      %302 = vmatprep.subr.mxu0 0.0
      %303 = vmatpush1.msra.mxu0 0.0
      %304 = vmatprep.subr.mxu0 0.0
      %305 = vmatpush1.msra.mxu0 0.0
      %306 = vmatprep.subr.mxu0 0.0
      %307 = vmatpush1.msra.mxu0 0.0
      %308 = vmatprep.subr.mxu0 0.0
      %309 = vmatpush1.msra.mxu0 0.0
      %310 = vmatprep.subr.mxu0 0.0
      %311 = vmatpush1.msra.mxu0 0.0
      %312 = vmatprep.subr.mxu0 0.0
      %313 = vmatpush1.msra.mxu0 0.0
      %314 = vmatprep.subr.mxu0 0.0
      %315 = vmatpush1.msra.mxu0 0.0
      %316 = vmatprep.subr.mxu0 0.0
      %317 = vmatpush1.msra.mxu0 0.0
      %318 = vmatprep.subr.mxu0 0.0
      %319 = vmatpush1.msra.mxu0 0.0
      %320 = vmatprep.subr.mxu0 0.0
      %321 = vmatpush1.msra.mxu0 0.0
      %322 = vmatprep.subr.mxu0 0.0
      %323 = vmatpush1.msra.mxu0 0.0
      %324 = vmatprep.subr.mxu0 0.0
      %325 = vmatpush1.msra.mxu0 0.0
      %326 = vmatprep.subr.mxu0 0.0
      %327 = vmatpush1.msra.mxu0 0.0
      %328 = vmatprep.subr.mxu0 0.0
      %329 = vmatpush1.msra.mxu0 0.0
      %330 = vmatprep.subr.mxu0 0.0
      %331 = vmatpush1.msra.mxu0 0.0
      %332 = vmatprep.subr.mxu0 0.0
      %333 = vmatpush1.msra.mxu0 0.0
      %334 = vmatprep.subr.mxu0 0.0
      %335 = vmatpush1.msra.mxu0 0.0
      %336 = vmatprep.subr.mxu0 0.0
      %337 = vmatpush1.msra.mxu0 0.0
      %338 = vmatprep.subr.mxu0 0.0
      %339 = vmatpush1.msra.mxu0 0.0
      %340 = vmatprep.subr.mxu0 0.0
      %341 = vmatpush1.msra.mxu0 0.0
      %342 = vmatprep.subr.mxu0 0.0
      %343 = vmatpush1.msra.mxu0 0.0
      %344 = vmatprep.subr.mxu0 0.0
      %345 = vmatpush1.msra.mxu0 0.0
      %346 = vmatprep.subr.mxu0 0.0
      %347 = vmatpush1.msra.mxu0 0.0
      %348 = vmatprep.mubr.f32.mxu0 0.0
      %349 = vmatmul.mubr.f32.gmra.mrb[0].mxu0 %v233
      %v350 = vpop.f32.mrb[0].mxu0
      %v351 = vadd.f32 0.0, %v350
      %v352 = vpop.f32.mrb[0].mxu0
      %353 = vmatprep.mubr.f32.mxu0 0.0
      %354 = vmatmul.mubr.f32.gmra.mrb[0].mxu0 %v236
      %v355 = vpop.f32.mrb[0].mxu0
      %v356 = vadd.f32 0.0, %v355
      %v357 = vpop.f32.mrb[0].mxu0
      %358 = vmatprep.mubr.f32.mxu0 0.0
      %359 = vmatmul.mubr.f32.gmra.mrb[0].mxu0 %v239
      %v360 = vpop.f32.mrb[0].mxu0
      %v361 = vadd.f32 0.0, %v360
      %v362 = vpop.f32.mrb[0].mxu0
      %363 = vmatprep.mubr.f32.mxu0 0.0
      %364 = vmatmul.mubr.f32.gmra.mrb[0].mxu0 %v242
      %v365 = vpop.f32.mrb[0].mxu0
      %v366 = vadd.f32 0.0, %v365
      %v367 = vpop.f32.mrb[0].mxu0
      %368 = vmatprep.mubr.f32.mxu0 0.0
      %369 = vmatmul.mubr.f32.gmra.mrb[0].mxu0 %v245
      %v370 = vpop.f32.mrb[0].mxu0
      %v371 = vadd.f32 0.0, %v370
      %v372 = vpop.f32.mrb[0].mxu0
      %373 = vmatprep.mubr.f32.mxu0 0.0
      %374 = vmatmul.mubr.f32.gmra.mrb[0].mxu0 %v248
      %v375 = vpop.f32.mrb[0].mxu0
      %v376 = vadd.f32 0.0, %v375
      %v377 = vpop.f32.mrb[0].mxu0
      %378 = vmatprep.mubr.f32.mxu0 0.0
      %379 = vmatmul.mubr.f32.gmra.mrb[0].mxu0 %v251
      %v380 = vpop.f32.mrb[0].mxu0
      %v381 = vadd.f32 0.0, %v380
      %v382 = vpop.f32.mrb[0].mxu0
      %383 = vmatprep.mubr.f32.mxu0 0.0
      %384 = vmatmul.mubr.f32.gmra.mrb[0].mxu0 %v254
      %v385 = vpop.f32.mrb[0].mxu0
      %v386 = vadd.f32 0.0, %v385
      %v387 = vpop.f32.mrb[0].mxu0
      %388 = vmatprep.mubr.f32.mxu0 0.0
      %389 = vmatmul.mubr.f32.gmra.mrb[0].mxu0 %v257
      %v390 = vpop.f32.mrb[0].mxu0
      %v391 = vadd.f32 0.0, %v390
      %v392 = vpop.f32.mrb[0].mxu0
      %393 = vmatprep.mubr.f32.mxu0 0.0
      %394 = vmatmul.mubr.f32.gmra.mrb[0].mxu0 %v260
      %v395 = vpop.f32.mrb[0].mxu0
      %v396 = vadd.f32 0.0, %v395
      %v397 = vpop.f32.mrb[0].mxu0
      %398 = vmatprep.mubr.f32.mxu0 0.0
      %399 = vmatmul.mubr.f32.gmra.mrb[0].mxu0 %v263
      %v400 = vpop.f32.mrb[0].mxu0
      %v401 = vadd.f32 0.0, %v400
      %v402 = vpop.f32.mrb[0].mxu0
      %403 = vmatprep.mubr.f32.mxu0 0.0
      %404 = vmatmul.mubr.f32.gmra.mrb[0].mxu0 %v266
      %v405 = vpop.f32.mrb[0].mxu0
      %v406 = vadd.f32 0.0, %v405
      %v407 = vpop.f32.mrb[0].mxu0
      %408 = vmatprep.mubr.f32.mxu0 0.0
      %409 = vmatmul.mubr.f32.gmra.mrb[0].mxu0 %v269
      %v410 = vpop.f32.mrb[0].mxu0
      %v411 = vadd.f32 0.0, %v410
      %v412 = vpop.f32.mrb[0].mxu0
      %413 = vmatprep.mubr.f32.mxu0 0.0
      %414 = vmatmul.mubr.f32.gmra.mrb[0].mxu0 %v272
      %v415 = vpop.f32.mrb[0].mxu0
      %v416 = vadd.f32 0.0, %v415
      %v417 = vpop.f32.mrb[0].mxu0
      %418 = vmatprep.mubr.f32.mxu0 0.0
      %419 = vmatmul.mubr.f32.gmra.mrb[0].mxu0 %v275
      %v420 = vpop.f32.mrb[0].mxu0
      %v421 = vadd.f32 0.0, %v420
      %v422 = vpop.f32.mrb[0].mxu0
      %423 = vmatprep.mubr.f32.mxu0 0.0
      %424 = vmatmul.mubr.f32.gmra.mrb[0].mxu0 %v278
      %v425 = vpop.f32.mrb[0].mxu0
      %v426 = vadd.f32 0.0, %v425
      %v427 = vpop.f32.mrb[0].mxu0
      %428 = vdwg.mxu0
      %v429 = vld [vmem:[%s2] sm:$0x3]
      %v430 = vlaneseq
      %v431 = vshrl.u32 %v430, 7
      %v432 = vsub.s32 0, %v431
      %v433 = vrot.slane %v429, %v432
      %v434 = vmul.f32 %v351, %v433
      %v435 = vmul.f32 %v356, %v433
      %v436 = vmul.f32 %v361, %v433
      %v437 = vmul.f32 %v366, %v433
      %v438 = vmul.f32 %v371, %v433
      %v439 = vmul.f32 %v376, %v433
      %v440 = vmul.f32 %v381, %v433
      %v441 = vmul.f32 %v386, %v433
      %v442 = vmul.f32 %v391, %v433
      %v443 = vmul.f32 %v396, %v433
      %v444 = vmul.f32 %v401, %v433
      %v445 = vmul.f32 %v406, %v433
      %v446 = vmul.f32 %v411, %v433
      %v447 = vmul.f32 %v416, %v433
      %v448 = vmul.f32 %v421, %v433
      %v449 = vmul.f32 %v426, %v433
      %v450 = vlaneseq
      %v451 = vshrl.u32 %v450, 7
      %v452 = vsub.s32 1, %v451
      %v453 = vrot.slane %v429, %v452
      %v454 = vadd.f32 %v434, %v453
      %v455 = vadd.f32 %v435, %v453
      %v456 = vadd.f32 %v436, %v453
      %v457 = vadd.f32 %v437, %v453
      %v458 = vadd.f32 %v438, %v453
      %v459 = vadd.f32 %v439, %v453
      %v460 = vadd.f32 %v440, %v453
      %v461 = vadd.f32 %v441, %v453
      %v462 = vadd.f32 %v442, %v453
      %v463 = vadd.f32 %v443, %v453
      %v464 = vadd.f32 %v444, %v453
      %v465 = vadd.f32 %v445, %v453
      %v466 = vadd.f32 %v446, %v453
      %v467 = vadd.f32 %v447, %v453
      %v468 = vadd.f32 %v448, %v453
      %v469 = vadd.f32 %v449, %v453
      %v470 = vxor.u32 %v454, 2147483648
      %v471 = vxor.u32 %v455, 2147483648
      %v472 = vxor.u32 %v456, 2147483648
      %v473 = vxor.u32 %v457, 2147483648
      %v474 = vxor.u32 %v458, 2147483648
      %v475 = vxor.u32 %v459, 2147483648
      %v476 = vxor.u32 %v460, 2147483648
      %v477 = vxor.u32 %v461, 2147483648
      %v478 = vxor.u32 %v462, 2147483648
      %v479 = vxor.u32 %v463, 2147483648
      %v480 = vxor.u32 %v464, 2147483648
      %v481 = vxor.u32 %v465, 2147483648
      %v482 = vxor.u32 %v466, 2147483648
      %v483 = vxor.u32 %v467, 2147483648
      %v484 = vxor.u32 %v468, 2147483648
      %v485 = vxor.u32 %v469, 2147483648
      %v486 = vmul.f32 %v470, 1.442695
      %v487 = vpow.pop %v486
      %v488 = vmul.f32 %v471, 1.442695
      %v489 = vpow.pop %v488
      %v490 = vmul.f32 %v472, 1.442695
      %v491 = vpow.pop %v490
      %v492 = vmul.f32 %v473, 1.442695
      %v493 = vpow.pop %v492
      %v494 = vmul.f32 %v474, 1.442695
      %v495 = vpow.pop %v494
      %v496 = vmul.f32 %v475, 1.442695
      %v497 = vpow.pop %v496
      %v498 = vmul.f32 %v476, 1.442695
      %v499 = vpow.pop %v498
      %v500 = vmul.f32 %v477, 1.442695
      %v501 = vpow.pop %v500
      %v502 = vmul.f32 %v478, 1.442695
      %v503 = vpow.pop %v502
      %v504 = vmul.f32 %v479, 1.442695
      %v505 = vpow.pop %v504
      %v506 = vmul.f32 %v480, 1.442695
      %v507 = vpow.pop %v506
      %v508 = vmul.f32 %v481, 1.442695
      %v509 = vpow.pop %v508
      %v510 = vmul.f32 %v482, 1.442695
      %v511 = vpow.pop %v510
      %v512 = vmul.f32 %v483, 1.442695
      %v513 = vpow.pop %v512
      %v514 = vmul.f32 %v484, 1.442695
      %v515 = vpow.pop %v514
      %v516 = vmul.f32 %v485, 1.442695
      %v517 = vpow.pop %v516
      %v518 = vadd.f32 %v487, 1.0
      %v519 = vadd.f32 %v489, 1.0
      %v520 = vadd.f32 %v491, 1.0
      %v521 = vadd.f32 %v493, 1.0
      %v522 = vadd.f32 %v495, 1.0
      %v523 = vadd.f32 %v497, 1.0
      %v524 = vadd.f32 %v499, 1.0
      %v525 = vadd.f32 %v501, 1.0
      %v526 = vadd.f32 %v503, 1.0
      %v527 = vadd.f32 %v505, 1.0
      %v528 = vadd.f32 %v507, 1.0
      %v529 = vadd.f32 %v509, 1.0
      %v530 = vadd.f32 %v511, 1.0
      %v531 = vadd.f32 %v513, 1.0
      %v532 = vadd.f32 %v515, 1.0
      %v533 = vadd.f32 %v517, 1.0
      %v534 = vrcp.pop %v518
      %v535 = vmul.f32 1.0, %v534
      %v536 = vrcp.pop %v519
      %v537 = vmul.f32 1.0, %v536
      %v538 = vrcp.pop %v520
      %v539 = vmul.f32 1.0, %v538
      %v540 = vrcp.pop %v521
      %v541 = vmul.f32 1.0, %v540
      %v542 = vrcp.pop %v522
      %v543 = vmul.f32 1.0, %v542
      %v544 = vrcp.pop %v523
      %v545 = vmul.f32 1.0, %v544
      %v546 = vrcp.pop %v524
      %v547 = vmul.f32 1.0, %v546
      %v548 = vrcp.pop %v525
      %v549 = vmul.f32 1.0, %v548
      %v550 = vrcp.pop %v526
      %v551 = vmul.f32 1.0, %v550
      %v552 = vrcp.pop %v527
      %v553 = vmul.f32 1.0, %v552
      %v554 = vrcp.pop %v528
      %v555 = vmul.f32 1.0, %v554
      %v556 = vrcp.pop %v529
      %v557 = vmul.f32 1.0, %v556
      %v558 = vrcp.pop %v530
      %v559 = vmul.f32 1.0, %v558
      %v560 = vrcp.pop %v531
      %v561 = vmul.f32 1.0, %v560
      %v562 = vrcp.pop %v532
      %v563 = vmul.f32 1.0, %v562
      %v564 = vrcp.pop %v533
      %v565 = vmul.f32 1.0, %v564
      %v566 = vmul.f32 %v454, %v535
      %v567 = vmul.f32 %v455, %v537
      %v568 = vmul.f32 %v456, %v539
      %v569 = vmul.f32 %v457, %v541
      %v570 = vmul.f32 %v458, %v543
      %v571 = vmul.f32 %v459, %v545
      %v572 = vmul.f32 %v460, %v547
      %v573 = vmul.f32 %v461, %v549
      %v574 = vmul.f32 %v462, %v551
      %v575 = vmul.f32 %v463, %v553
      %v576 = vmul.f32 %v464, %v555
      %v577 = vmul.f32 %v465, %v557
      %v578 = vmul.f32 %v466, %v559
      %v579 = vmul.f32 %v467, %v561
      %v580 = vmul.f32 %v468, %v563
      %v581 = vmul.f32 %v469, %v565
      %vm582 = vcmask 64512
      %583 = vst.msk [vmem:[%s208] sm:$0xff] %vm582, %v566
      %584 = vst.msk [vmem:[%s208 + $0x8] sm:$0xff] %vm582, %v567
      %585 = vst.msk [vmem:[%s208 + $0x10] sm:$0xff] %vm582, %v568
      %586 = vst.msk [vmem:[%s208 + $0x18] sm:$0xff] %vm582, %v569
      %587 = vst.msk [vmem:[%s208 + $0x20] sm:$0xff] %vm582, %v570
      %588 = vst.msk [vmem:[%s208 + $0x28] sm:$0xff] %vm582, %v571
      %589 = vst.msk [vmem:[%s208 + $0x30] sm:$0xff] %vm582, %v572
      %590 = vst.msk [vmem:[%s208 + $0x38] sm:$0xff] %vm582, %v573
      %591 = vst.msk [vmem:[%s208 + $0x40] sm:$0xff] %vm582, %v574
      %592 = vst.msk [vmem:[%s208 + $0x48] sm:$0xff] %vm582, %v575
      %593 = vst.msk [vmem:[%s208 + $0x50] sm:$0xff] %vm582, %v576
      %594 = vst.msk [vmem:[%s208 + $0x58] sm:$0xff] %vm582, %v577
      %595 = vst.msk [vmem:[%s208 + $0x60] sm:$0xff] %vm582, %v578
      %596 = vst.msk [vmem:[%s208 + $0x68] sm:$0xff] %vm582, %v579
      %597 = vst.msk [vmem:[%s208 + $0x70] sm:$0xff] %vm582, %v580
      %598 = vst.msk [vmem:[%s208 + $0x78] sm:$0xff] %vm582, %v581
      %s599 = smul.u32 16, %s19
      %p600 = scmp.lt.s32.totalorder %s18, 1
      %s601 = scalar_select %p600, %s18, 1
      %p602 = scmp.lt.s32.totalorder %s599, 31
      %s603 = scalar_select %p602, %s599, 31
      %s604 = smul.addr %s601, 32
      %s605 = sadd.s32 %s603, %s604
      %s606 = smul.addr %s605, 8
      %s607 = scalar_lea.vmem %s3, %s606
      // Predicated region
      $region33: #{tpu_custom_call.1} parent=31 // pred_check
        %p608 = pneg %p116
      $region34: #{tpu_custom_call.1} parent=31 // pred_check_branch
        %610 = sbr.rel (%p608) target = $region36
      $region35: #{tpu_custom_call.1} parent=31 // pred_region
        %s611 = smul.u32 16, %s19
      $region36: #{tpu_custom_call.1} parent=31 // pred_fallthru
        _
    $region32: #{tpu_custom_call.1} parent=5 // pred_fallthru
      _
    %p612 = scmp.le.s32.totalorder 2, %s9
    // Predicated region
    $region37: #{tpu_custom_call.1} parent=5 // pred_check
      %p613 = pneg %p612
    $region38: #{tpu_custom_call.1} parent=5 // pred_check_branch
      %615 = sbr.rel (%p613) target = $region40
    $region39: #{tpu_custom_call.1} parent=5 // pred_region
      %s616 = ssub.s32 %s9, 2
      // Predicated region
      $region41: #{tpu_custom_call.1} parent=39 // pred_check
        %p617 = pneg %p122
      $region42: #{tpu_custom_call.1} parent=39 // pred_check_branch
        %619 = sbr.rel (%p617) target = $region44
      $region43: #{tpu_custom_call.1} parent=39 // pred_region
        %s620 = smul.u32 16, %s21
        %p621 = scmp.lt.s32.totalorder %s20, 1
        %s622 = scalar_select %p621, %s20, 1
        %p623 = scmp.lt.s32.totalorder %s620, 31
        %s624 = scalar_select %p623, %s620, 31
        %s625 = smul.addr %s622, 32
        %s626 = sadd.s32 %s624, %s625
        %s627 = smul.addr %s626, 8
        %s628 = scalar_lea.vmem %s3, %s627
      $region44: #{tpu_custom_call.1} parent=39 // pred_fallthru
        _
    $region40: #{tpu_custom_call.1} parent=5 // pred_fallthru
      _
  $region6: #{tpu_custom_call.1} parent=0 // loop_footer
    %s13 = sadd.s32 1, %s9
  $region7: #{tpu_custom_call.1} parent=0 // loop_footer_branch
    %8 = sbr.rel target = $region3
  $region8: #{tpu_custom_call.1} parent=0 // loop_exit
    _

</llo_original>
